<compile_context>
chip_gen: v5e
topology: v5e:2x2
jax: 0.10.0
libtpu: 0.0.40
codegen_flags: <defaults>
</compile_context>

<pallas_src>
import functools

import jax
import jax.numpy as jnp
from jax.experimental import pallas as pl
from jax.experimental.pallas import tpu as pltpu

EPS = 1e-5                       # nn.BatchNorm2d default eps
_VMEM_LIMIT = 32 * 1024 * 1024   # safe scoped limit on v5e/v6e/v7x
_BLOCK_BYTES = 2 * 1024 * 1024   # ~2 MiB per streamed block


# ---------------------------------------------------------------------------
# Kernels
# ---------------------------------------------------------------------------
def _stats_kernel(x_ref, sum_ref, sq_ref):
    """Per-row (= per (n, c)) sum and sum-of-squares over lane (HW) tiles.

    x_ref:   (r_tile, hw_tile)     input tile, HW on the 128-lane axis
    sum_ref: (1, r_tile, 1) f32    resident accumulator (same block across t)
    sq_ref:  (1, r_tile, 1) f32    resident accumulator
    """
    @pl.when(pl.program_id(2) == 0)
    def _init():
        sum_ref[...] = jnp.zeros_like(sum_ref)
        sq_ref[...] = jnp.zeros_like(sq_ref)

    x = x_ref[...].astype(jnp.float32)                       # f32 accumulation
    sum_ref[...] += jnp.sum(x, axis=-1, keepdims=True)[None]  # lane reduce (XLU,
    sq_ref[...] += jnp.sum(x * x, axis=-1, keepdims=True)[None]  # slack: mem-bound)


def _affine_kernel(x_ref, scale_ref, bias_ref, o_ref):
    """o = x * scale + bias, one FMA per element (scale/bias pre-folded per row).

    x_ref:     (r_tile, hw_tile)
    scale_ref: (r_tile, 1) f32   per-(sample, channel) scale
    bias_ref:  (r_tile, 1) f32   per-(sample, channel) bias
    """
    x = x_ref[...].astype(jnp.float32)
    o_ref[...] = (x * scale_ref[...] + bias_ref[...]).astype(o_ref.dtype)


# ---------------------------------------------------------------------------
# Tile-size helpers (exact divisors satisfying the (8, 128) rules)
# ---------------------------------------------------------------------------
def _pick_lane_tile(n, max_elems):
    """Largest multiple-of-128 divisor of n that fits max_elems, else full axis."""
    if n % 128 != 0:
        return n                       # full axis is always a legal lane extent
    t = (max(128, min(n, max_elems)) // 128) * 128
    while t >= 128:
        if n % t == 0:
            return t
        t -= 128
    return n


def _pick_sublane_tile(n, max_rows):
    """Largest multiple-of-8 divisor of n that fits max_rows, else full axis."""
    if n <= max_rows:
        return n
    if n % 8 == 0:
        t = (max_rows // 8) * 8
        while t >= 8:
            if n % t == 0:
                return t
            t -= 8
    # TODO(synk): pathological row counts (8 * large prime) fall back to the full
    # axis; a masked non-dividing tile would be needed to bound VMEM there.
    return n


# ---------------------------------------------------------------------------
# Wrapper: ConditionalBatchNorm2d forward
# ---------------------------------------------------------------------------
@functools.partial(jax.jit, static_argnums=(3,))
def conditional_batch_norm_2d(x, y, embed_weight, num_features, eps=EPS):
    """x: (N, C, H, W), y: (N,) int class ids, embed_weight: (num_classes, 2C)."""
    N, C, H, W = x.shape
    assert C == num_features
    HW = H * W
    R = N * C
    itemsize = jnp.dtype(x.dtype).itemsize

    # Embedding lookup + chunk(2, dim=1) — tiny glue, plain JAX.
    gb = embed_weight[y].astype(jnp.float32)          # (N, 2C)
    gamma = gb[:, :num_features]                      # (N, C)
    beta = gb[:, num_features:]                       # (N, C)

    # Free reshape (contiguous-dim merge): HW lands on the lane axis, NCHW kept.
    x2 = x.reshape(R, HW)

    # ---- dtype-aware tiles, ~2 MiB streamed blocks -------------------------
    budget_elems = max(1024, _BLOCK_BYTES // itemsize)
    hw_tile = _pick_lane_tile(HW, max(128, budget_elems // 8))
    r_tile = _pick_sublane_tile(R, max(8, budget_elems // hw_tile))

    num_t = HW // hw_tile
    par_hw = 2 if (num_t >= 2 and num_t % 2 == 0) else 1   # v7x megacore split
    seq_t = num_t // par_hw
    num_r = R // r_tile

    # ---------------- pass 1: per-(n, c) partial sums -----------------------
    sums, sqs = pl.pallas_call(
        _stats_kernel,
        out_shape=(
            jax.ShapeDtypeStruct((par_hw, R, 1), jnp.float32),
            jax.ShapeDtypeStruct((par_hw, R, 1), jnp.float32),
        ),
        grid=(num_r, par_hw, seq_t),
        in_specs=[pl.BlockSpec((r_tile, hw_tile),
                               lambda r, p, t: (r, p * seq_t + t))],
        out_specs=(
            pl.BlockSpec((1, r_tile, 1), lambda r, p, t: (p, r, 0)),
            pl.BlockSpec((1, r_tile, 1), lambda r, p, t: (p, r, 0)),
        ),
        compiler_params=pltpu.CompilerParams(
            dimension_semantics=("parallel", "parallel", "arbitrary"),
            vmem_limit_bytes=_VMEM_LIMIT,
        ),
    )(x2)

    # Tiny (N, C)-sized math: fold partial sums -> per-channel mean/var, then
    # fold gamma/beta/mean/var into a single per-(sample, channel) scale/bias.
    count = N * HW
    ch_sum = jnp.sum(sums.reshape(par_hw, N, C), axis=(0, 1))    # (C,)
    ch_sq = jnp.sum(sqs.reshape(par_hw, N, C), axis=(0, 1))      # (C,)
    mean = ch_sum / count
    # NOTE: single-pass E[x^2]-E[x]^2 with f32 accumulation; can lose precision
    # for |mean| >> std (standard fused-BN trade-off).
    var = jnp.maximum(ch_sq / count - mean * mean, 0.0)          # biased var
    inv_std = 1.0 / jnp.sqrt(var + eps)
    scale = gamma * inv_std[None, :]                             # (N, C)
    bias = beta - mean[None, :] * scale                          # (N, C)
    scale_r = scale.reshape(R, 1)
    bias_r = bias.reshape(R, 1)

    # ---------------- pass 2: o = x * scale + bias (NCHW in, NCHW out) ------
    out2 = pl.pallas_call(
        _affine_kernel,
        out_shape=jax.ShapeDtypeStruct((R, HW), x.dtype),
        grid=(num_r, num_t),
        in_specs=[
            pl.BlockSpec((r_tile, hw_tile), lambda r, t: (r, t)),
            pl.BlockSpec((r_tile, 1), lambda r, t: (r, 0)),
            pl.BlockSpec((r_tile, 1), lambda r, t: (r, 0)),
        ],
        out_specs=pl.BlockSpec((r_tile, hw_tile), lambda r, t: (r, t)),
        compiler_params=pltpu.CompilerParams(
            dimension_semantics=("parallel", "parallel"),
            vmem_limit_bytes=_VMEM_LIMIT,
        ),
    )(x2, scale_r, bias_r)

    return out2.reshape(N, C, H, W)


# ---------------------------------------------------------------------------
# Pure-JAX reference for validation
# ---------------------------------------------------------------------------
def _reference(x, y, embed_weight, num_features):
    N, C, H, W = x.shape
    xf = x.astype(jnp.float32)
    mean = jnp.mean(xf, axis=(0, 2, 3), keepdims=True)
    var = jnp.mean((xf - mean) ** 2, axis=(0, 2, 3), keepdims=True)
    xhat = (xf - mean) / jnp.sqrt(var + EPS)
    gb = embed_weight[y]
    gamma = gb[:, :num_features].reshape(N, C, 1, 1)
    beta = gb[:, num_features:].reshape(N, C, 1, 1)
    return (gamma * xhat + beta).astype(x.dtype)


if __name__ == "__main__":
    num_features = 4
    num_classes = 10
    N, C, H, W = 2, num_features, 16, 16

    key = jax.random.PRNGKey(0)
    kx, ky, ke = jax.random.split(key, 3)

    x = jax.random.normal(kx, (N, C, H, W), dtype=jnp.float32)
    y = jax.random.randint(ky, (N,), 0, num_classes, dtype=jnp.int32)

    # Deterministic embedding init matching the module's __init__:
    #   embed.weight[:, :C] ~ Normal(1, 0.02);  embed.weight[:, C:] = 0
    gamma_part = 1.0 + 0.02 * jax.random.normal(
        ke, (num_classes, num_features), dtype=jnp.float32)
    beta_part = jnp.zeros((num_classes, num_features), dtype=jnp.float32)
    embed_weight = jnp.concatenate([gamma_part, beta_part], axis=1)   # (nc, 2C)

    out = conditional_batch_norm_2d(x, y, embed_weight, num_features)
    out = jax.block_until_ready(out)

    ref = _reference(x, y, embed_weight, num_features)
    assert out.shape == (N, C, H, W)
    assert jnp.allclose(out, ref, atol=1e-4, rtol=1e-4), float(
        jnp.max(jnp.abs(out - ref)))

    print("KERNEL_OK")
</pallas_src>

<mosaic_0001>
module attributes {stable_mosaic.version = 11 : i64} {
  func.func @_stats_kernel(%arg0: i32, %arg1: i32, %arg2: i32, %arg3: memref<8x256xf32, #tpu.memory_space<vmem>>, %arg4: memref<1x8x1xf32, #tpu.memory_space<vmem>>, %arg5: memref<1x8x1xf32, #tpu.memory_space<vmem>>) attributes {dimension_semantics = [#tpu.dimension_semantics<parallel>, #tpu.dimension_semantics<parallel>, #tpu.dimension_semantics<arbitrary>], iteration_bounds = array<i64: 1, 1, 1>, scalar_prefetch = 0 : i64, scratch_operands = 0 : i64, tpu.core_type = #tpu.core_type<tc>, window_params = [{transform_indices = @transform_0, window_bounds = array<i64: 8, 256>}, {transform_indices = @transform_1, window_bounds = array<i64: 1, 8, 1>}, {transform_indices = @transform_2, window_bounds = array<i64: 1, 8, 1>}]} {
    %c0_i32 = arith.constant 0 : i32
    %0 = arith.cmpi eq, %arg2, %c0_i32 : i32
    %1 = arith.extui %0 : i1 to i32
    %c0_i32_0 = arith.constant 0 : i32
    %2 = arith.cmpi ne, %1, %c0_i32_0 : i32
    scf.if %2 {
      %cst_15 = arith.constant 0.000000e+00 : f32
      %17 = vector.broadcast %cst_15 : f32 to vector<1x8x1xf32>
      %c0_16 = arith.constant 0 : index
      %c0_17 = arith.constant 0 : index
      %c0_18 = arith.constant 0 : index
      %18 = vector.load %arg4[%c0_16, %c0_17, %c0_18] : memref<1x8x1xf32, #tpu.memory_space<vmem>>, vector<1x8x1xf32>
      tpu.vector_store %arg4[%c0_16, %c0_17, %c0_18], %17 {strides = array<i32>} : memref<1x8x1xf32, #tpu.memory_space<vmem>>, vector<1x8x1xf32>,
      %cst_19 = arith.constant 0.000000e+00 : f32
      %19 = vector.broadcast %cst_19 : f32 to vector<1x8x1xf32>
      %c0_20 = arith.constant 0 : index
      %c0_21 = arith.constant 0 : index
      %c0_22 = arith.constant 0 : index
      %20 = vector.load %arg5[%c0_20, %c0_21, %c0_22] : memref<1x8x1xf32, #tpu.memory_space<vmem>>, vector<1x8x1xf32>
      tpu.vector_store %arg5[%c0_20, %c0_21, %c0_22], %19 {strides = array<i32>} : memref<1x8x1xf32, #tpu.memory_space<vmem>>, vector<1x8x1xf32>,
    } else {
    }
    %c0 = arith.constant 0 : index
    %c0_1 = arith.constant 0 : index
    %3 = vector.load %arg3[%c0, %c0_1] : memref<8x256xf32, #tpu.memory_space<vmem>>, vector<8x256xf32>
    %c0_2 = arith.constant 0 : index
    %c0_3 = arith.constant 0 : index
    %c0_4 = arith.constant 0 : index
    %4 = vector.load %arg4[%c0_2, %c0_3, %c0_4] : memref<1x8x1xf32, #tpu.memory_space<vmem>>, vector<1x8x1xf32>
    %cst = arith.constant dense<0.000000e+00> : vector<8xf32>
    %5 = vector.multi_reduction <add>, %3, %cst [1] : vector<8x256xf32> to vector<8xf32>
    %6 = vector.shape_cast %5 : vector<8xf32> to vector<8x1xf32>
    %7 = vector.shape_cast %6 : vector<8x1xf32> to vector<1x8x1xf32>
    %8 = arith.addf %4, %7 : vector<1x8x1xf32>
    %c0_5 = arith.constant 0 : index
    %c0_6 = arith.constant 0 : index
    %c0_7 = arith.constant 0 : index
    %9 = vector.load %arg4[%c0_5, %c0_6, %c0_7] : memref<1x8x1xf32, #tpu.memory_space<vmem>>, vector<1x8x1xf32>
    tpu.vector_store %arg4[%c0_5, %c0_6, %c0_7], %8 {strides = array<i32>} : memref<1x8x1xf32, #tpu.memory_space<vmem>>, vector<1x8x1xf32>,
    %c0_8 = arith.constant 0 : index
    %c0_9 = arith.constant 0 : index
    %c0_10 = arith.constant 0 : index
    %10 = vector.load %arg5[%c0_8, %c0_9, %c0_10] : memref<1x8x1xf32, #tpu.memory_space<vmem>>, vector<1x8x1xf32>
    %11 = arith.mulf %3, %3 : vector<8x256xf32>
    %cst_11 = arith.constant dense<0.000000e+00> : vector<8xf32>
    %12 = vector.multi_reduction <add>, %11, %cst_11 [1] : vector<8x256xf32> to vector<8xf32>
    %13 = vector.shape_cast %12 : vector<8xf32> to vector<8x1xf32>
    %14 = vector.shape_cast %13 : vector<8x1xf32> to vector<1x8x1xf32>
    %15 = arith.addf %10, %14 : vector<1x8x1xf32>
    %c0_12 = arith.constant 0 : index
    %c0_13 = arith.constant 0 : index
    %c0_14 = arith.constant 0 : index
    %16 = vector.load %arg5[%c0_12, %c0_13, %c0_14] : memref<1x8x1xf32, #tpu.memory_space<vmem>>, vector<1x8x1xf32>
    tpu.vector_store %arg5[%c0_12, %c0_13, %c0_14], %15 {strides = array<i32>} : memref<1x8x1xf32, #tpu.memory_space<vmem>>, vector<1x8x1xf32>,
    return
  }
  func.func @transform_0(%arg0: i32, %arg1: i32, %arg2: i32) -> (i32, i32) {
    %c1_i32 = arith.constant 1 : i32
    %0 = arith.muli %arg1, %c1_i32 : i32
    %1 = arith.addi %0, %arg2 : i32
    %c0_i32 = arith.constant 0 : i32
    return %arg0, %1 : i32, i32
  }
  func.func @transform_1(%arg0: i32, %arg1: i32, %arg2: i32) -> (i32, i32, i32) {
    %c0_i32 = arith.constant 0 : i32
    %c0_i32_0 = arith.constant 0 : i32
    return %arg1, %arg0, %c0_i32 : i32, i32, i32
  }
  func.func @transform_2(%arg0: i32, %arg1: i32, %arg2: i32) -> (i32, i32, i32) {
    %c0_i32 = arith.constant 0 : i32
    %c0_i32_0 = arith.constant 0 : i32
    return %arg1, %arg0, %c0_i32 : i32, i32, i32
  }
}

module attributes {stable_mosaic.version = 11 : i64} {
  func.func @_affine_kernel(%arg0: i32, %arg1: i32, %arg2: memref<8x256xf32, #tpu.memory_space<vmem>>, %arg3: memref<8x1xf32, #tpu.memory_space<vmem>>, %arg4: memref<8x1xf32, #tpu.memory_space<vmem>>, %arg5: memref<8x256xf32, #tpu.memory_space<vmem>>) attributes {dimension_semantics = [#tpu.dimension_semantics<parallel>, #tpu.dimension_semantics<parallel>], iteration_bounds = array<i64: 1, 1>, scalar_prefetch = 0 : i64, scratch_operands = 0 : i64, tpu.core_type = #tpu.core_type<tc>, window_params = [{transform_indices = @transform_0, window_bounds = array<i64: 8, 256>}, {transform_indices = @transform_1, window_bounds = array<i64: 8, 1>}, {transform_indices = @transform_2, window_bounds = array<i64: 8, 1>}, {transform_indices = @transform_3, window_bounds = array<i64: 8, 256>}]} {
    %c0 = arith.constant 0 : index
    %c0_0 = arith.constant 0 : index
    %0 = vector.load %arg2[%c0, %c0_0] : memref<8x256xf32, #tpu.memory_space<vmem>>, vector<8x256xf32>
    %c0_1 = arith.constant 0 : index
    %c0_2 = arith.constant 0 : index
    %1 = vector.load %arg3[%c0_1, %c0_2] : memref<8x1xf32, #tpu.memory_space<vmem>>, vector<8x1xf32>
    %2 = vector.broadcast %1 : vector<8x1xf32> to vector<8x256xf32>
    %3 = arith.mulf %0, %2 : vector<8x256xf32>
    %c0_3 = arith.constant 0 : index
    %c0_4 = arith.constant 0 : index
    %4 = vector.load %arg4[%c0_3, %c0_4] : memref<8x1xf32, #tpu.memory_space<vmem>>, vector<8x1xf32>
    %5 = vector.broadcast %4 : vector<8x1xf32> to vector<8x256xf32>
    %6 = arith.addf %3, %5 : vector<8x256xf32>
    %c0_5 = arith.constant 0 : index
    %c0_6 = arith.constant 0 : index
    %7 = vector.load %arg5[%c0_5, %c0_6] : memref<8x256xf32, #tpu.memory_space<vmem>>, vector<8x256xf32>
    tpu.vector_store %arg5[%c0_5, %c0_6], %6 {strides = array<i32>} : memref<8x256xf32, #tpu.memory_space<vmem>>, vector<8x256xf32>,
    return
  }
  func.func @transform_0(%arg0: i32, %arg1: i32) -> (i32, i32) {
    %c0_i32 = arith.constant 0 : i32
    return %arg0, %arg1 : i32, i32
  }
  func.func @transform_1(%arg0: i32, %arg1: i32) -> (i32, i32) {
    %c0_i32 = arith.constant 0 : i32
    %c0_i32_0 = arith.constant 0 : i32
    return %arg0, %c0_i32 : i32, i32
  }
  func.func @transform_2(%arg0: i32, %arg1: i32) -> (i32, i32) {
    %c0_i32 = arith.constant 0 : i32
    %c0_i32_0 = arith.constant 0 : i32
    return %arg0, %c0_i32 : i32, i32
  }
  func.func @transform_3(%arg0: i32, %arg1: i32) -> (i32, i32) {
    %c0_i32 = arith.constant 0 : i32
    return %arg0, %arg1 : i32, i32
  }
}

</mosaic_0001>

<llo_original>
// kernel: conditional_batch_norm_2d.3
$region0: #{conditional_batch_norm_2d.3}
  #allocation0 [shape = 'u32[]', space=smem, size = 0x4, offset = 0x4, fixed_abs, tag = 'smem constant byte address 0x4 - core index']
  #allocation1 [shape = 'u32[72,128]{1,0:T(1,128)}', space=vmem, size = 0x9000, scoped, tag = 'internal scratch']
  %s0 = inlined_call_operand.vmem [shape: f32[8,256], index: 0, kind: input, shape index: {}]
  %s1 = inlined_call_operand.vmem [shape: f32[8,1], index: 1, kind: input, shape index: {}]
  %s2 = inlined_call_operand.vmem [shape: f32[8,1], index: 2, kind: input, shape index: {}]
  %s3 = inlined_call_operand.vmem [shape: f32[8,256], index: 3, kind: output, shape index: {}]
  %s4 = sld [smem:[#allocation0]]
  $region22: #{conditional_batch_norm_2d.3} parent=0
    _
  %s6 = ssub.s32 1, %s4
  %s7 = scalar_select 0, %s6, %s4
  // Predicated region
  $region2: #{conditional_batch_norm_2d.3} parent=0 // pred_check
    _
  $region3: #{conditional_batch_norm_2d.3} parent=0 // pred_check_branch
    %9 = sbr.rel (0) target = $region5
  $region4: #{conditional_batch_norm_2d.3} parent=0 // pred_region
    _
  $region5: #{conditional_batch_norm_2d.3} parent=0 // pred_fallthru
    _
  // Predicated region
  $region6: #{conditional_batch_norm_2d.3} parent=0 // pred_check
    _
  $region7: #{conditional_batch_norm_2d.3} parent=0 // pred_check_branch
    %11 = sbr.rel (0) target = $region9
  $region8: #{conditional_batch_norm_2d.3} parent=0 // pred_region
    _
  $region9: #{conditional_batch_norm_2d.3} parent=0 // pred_fallthru
    _
  // Predicated region
  $region10: #{conditional_batch_norm_2d.3} parent=0 // pred_check
    _
  $region11: #{conditional_batch_norm_2d.3} parent=0 // pred_check_branch
    %13 = sbr.rel (0) target = $region13
  $region12: #{conditional_batch_norm_2d.3} parent=0 // pred_region
    _
  $region13: #{conditional_batch_norm_2d.3} parent=0 // pred_fallthru
    _
  %v14 = vld [vmem:[%s0] sm:$0xff]
  %v15 = vld [vmem:[%s0 + $0x8] sm:$0xff]
  %v16 = vld [vmem:[%s1] sm:$0xff]
  %18 = vset.pattern.permute.xlu0 0
  %19 = vperm.xlu0 %18, %v16
  %v20 = vpop.permute.xlu0 %19
  %v22 = vmul.f32 %v14, %v20
  %v23 = vmul.f32 %v15, %v20
  %v24 = vld [vmem:[%s2] sm:$0xff]
  %26 = vset.pattern.permute.xlu0 0
  %27 = vperm.xlu0 %26, %v24
  %v28 = vpop.permute.xlu0 %27
  %v30 = vadd.f32 %v22, %v28
  %v31 = vadd.f32 %v23, %v28
  %32 = vst [vmem:[%s3] sm:$0xff] %v30
  %33 = vst [vmem:[%s3 + $0x8] sm:$0xff] %v31
  // Predicated region
  $region14: #{conditional_batch_norm_2d.3} parent=0 // pred_check
    _
  $region15: #{conditional_batch_norm_2d.3} parent=0 // pred_check_branch
    %35 = sbr.rel (0) target = $region17
  $region16: #{conditional_batch_norm_2d.3} parent=0 // pred_region
    _
  $region17: #{conditional_batch_norm_2d.3} parent=0 // pred_fallthru
    _
  // Predicated region
  $region18: #{conditional_batch_norm_2d.3} parent=0 // pred_check
    _
  $region19: #{conditional_batch_norm_2d.3} parent=0 // pred_check_branch
    %37 = sbr.rel (0) target = $region21
  $region20: #{conditional_batch_norm_2d.3} parent=0 // pred_region
    _
  $region21: #{conditional_batch_norm_2d.3} parent=0 // pred_fallthru
    _

// kernel: conditional_batch_norm_2d.2
$region0: #{conditional_batch_norm_2d.2}
  #allocation0 [shape = 'u32[]', space=smem, size = 0x4, offset = 0x4, fixed_abs, tag = 'smem constant byte address 0x4 - core index']
  #allocation1 [shape = 'u32[72,128]{1,0:T(1,128)}', space=vmem, size = 0x9000, scoped, tag = 'internal scratch']
  %s0 = inlined_call_operand.vmem [shape: f32[8,256], index: 0, kind: input, shape index: {}]
  %s1 = inlined_call_operand.vmem [shape: f32[1,8,1], index: 1, kind: output, shape index: {0}]
  %s2 = inlined_call_operand.vmem [shape: f32[1,8,1], index: 2, kind: output, shape index: {1}]
  %3 = xla_tuple %s1, %s2
  %s4 = sld [smem:[#allocation0]]
  $region26: #{conditional_batch_norm_2d.2} parent=0
    _
  %s6 = ssub.s32 1, %s4
  %s7 = scalar_select 0, %s6, %s4
  // Predicated region
  $region2: #{conditional_batch_norm_2d.2} parent=0 // pred_check
    _
  $region3: #{conditional_batch_norm_2d.2} parent=0 // pred_check_branch
    %9 = sbr.rel (0) target = $region5
  $region4: #{conditional_batch_norm_2d.2} parent=0 // pred_region
    %s10 = sadd.s32 0, 0
    %s11 = smul.u32 2, %s10
    %p12 = scmp.lt.s32.totalorder %s11, 1
    %s13 = scalar_select %p12, %s11, 1
    %s14 = smul.addr %s13, 8
    %s15 = scalar_lea.vmem %s0, %s14
    %s16 = sadd.s32 0, 0
    %s17 = smul.u32 2, %s16
  $region5: #{conditional_batch_norm_2d.2} parent=0 // pred_fallthru
    _
  %s18 = sadd.s32 0, 0
  %s19 = smul.u32 2, %s18
  %p20 = scmp.lt.s32.totalorder %s19, 1
  %s21 = scalar_select %p20, %s19, 1
  %s22 = smul.addr %s21, 8
  %s23 = scalar_lea.vmem %s0, %s22
  %s24 = sadd.s32 0, 0
  %s25 = smul.u32 2, %s24
  %p26 = scmp.lt.s32.totalorder %s25, 1
  %s27 = scalar_select %p26, %s25, 1
  %s28 = smul.addr %s27, 8
  %s29 = scalar_lea.vmem %s0, %s28
  %s30 = sadd.s32 0, 0
  %s31 = smul.u32 2, %s30
  %p32 = scmp.eq.s32.totalorder 0, 0
  // Predicated region
  $region6: #{conditional_batch_norm_2d.2} parent=0 // pred_check
    %p33 = pneg %p32
  $region7: #{conditional_batch_norm_2d.2} parent=0 // pred_check_branch
    %35 = sbr.rel (%p33) target = $region9
  $region8: #{conditional_batch_norm_2d.2} parent=0 // pred_region
    %vm36 = vcmask 7168
    %37 = vst.msk [vmem:[%s1] sm:$0xff] %vm36, 0.0
    %38 = vst.msk [vmem:[%s2] sm:$0xff] %vm36, 0.0
  $region9: #{conditional_batch_norm_2d.2} parent=0 // pred_fallthru
    _
  %v39 = vld [vmem:[%s29] sm:$0xff]
  %v40 = vld [vmem:[%s29 + $0x8] sm:$0xff]
  %v41 = vld [vmem:[%s1] sm:$0xff]
  %v42 = vadd.f32 %v39, %v40
  %43 = vadd.xlane.f32.xlu0 %v42
  %v44 = vpop.xlane.xlu0 %43
  %v45 = vadd.f32 %v41, %v44
  %vm46 = vcmask 7168
  %47 = vst.msk [vmem:[%s1] sm:$0xff] %vm46, %v45
  %v48 = vld [vmem:[%s2] sm:$0xff]
  %v49 = vmul.f32 %v39, %v39
  %v50 = vmul.f32 %v40, %v40
  %v51 = vadd.f32 %v49, %v50
  %52 = vadd.xlane.f32.xlu0 %v51
  %v53 = vpop.xlane.xlu0 %52
  %v54 = vadd.f32 %v48, %v53
  %55 = vst.msk [vmem:[%s2] sm:$0xff] %vm46, %v54
  // Predicated region
  $region10: #{conditional_batch_norm_2d.2} parent=0 // pred_check
    _
  $region11: #{conditional_batch_norm_2d.2} parent=0 // pred_check_branch
    %57 = sbr.rel (0) target = $region13
  $region12: #{conditional_batch_norm_2d.2} parent=0 // pred_region
    _
  $region13: #{conditional_batch_norm_2d.2} parent=0 // pred_fallthru
    _
  // Predicated region
  $region14: #{conditional_batch_norm_2d.2} parent=0 // pred_check
    _
  $region15: #{conditional_batch_norm_2d.2} parent=0 // pred_check_branch
    %59 = sbr.rel (0) target = $region17
  $region16: #{conditional_batch_norm_2d.2} parent=0 // pred_region
    _
  $region17: #{conditional_batch_norm_2d.2} parent=0 // pred_fallthru
    _
  // Predicated region
  $region18: #{conditional_batch_norm_2d.2} parent=0 // pred_check
    _
  $region19: #{conditional_batch_norm_2d.2} parent=0 // pred_check_branch
    %61 = sbr.rel (0) target = $region21
  $region20: #{conditional_batch_norm_2d.2} parent=0 // pred_region
    _
  $region21: #{conditional_batch_norm_2d.2} parent=0 // pred_fallthru
    _
  // Predicated region
  $region22: #{conditional_batch_norm_2d.2} parent=0 // pred_check
    _
  $region23: #{conditional_batch_norm_2d.2} parent=0 // pred_check_branch
    %63 = sbr.rel (0) target = $region25
  $region24: #{conditional_batch_norm_2d.2} parent=0 // pred_region
    _
  $region25: #{conditional_batch_norm_2d.2} parent=0 // pred_fallthru
    _

</llo_original>
